<compile_context>
chip_gen: v7x
topology: tpu7x:2x2x1
jax: 0.10.0
libtpu: 0.0.40
codegen_flags: <defaults>
</compile_context>

<pallas_src>
import re
from functools import partial

import jax
import jax.numpy as jnp
from jax.experimental import pallas as pl
from jax.experimental.pallas import tpu as pltpu


def _mlp_kernel(x_ref, w1_ref, b1_ref, w2_ref, b2_ref, w3_ref, b3_ref,
                w4_ref, b4_ref, o_ref, *, act_dtype):
    # Layers 1-3: bf16 MXU matmuls with f32 accumulation; bias + ReLU in
    # act_dtype (bf16 on v6e/v7x, f32 on v5e).
    h = jnp.dot(x_ref[...].astype(jnp.bfloat16), w1_ref[...],
                preferred_element_type=jnp.float32)
    h = jnp.maximum(h.astype(act_dtype) + b1_ref[...], 0.0)
    h = jnp.dot(h.astype(jnp.bfloat16), w2_ref[...],
                preferred_element_type=jnp.float32)
    h = jnp.maximum(h.astype(act_dtype) + b2_ref[...], 0.0)
    h = jnp.dot(h.astype(jnp.bfloat16), w3_ref[...],
                preferred_element_type=jnp.float32)
    h = jnp.maximum(h.astype(act_dtype) + b3_ref[...], 0.0)
    # Layer 4 (out_features == 1): contract h's feature dim against the (1, 32)
    # weight row (q @ k.T style NT matmul) so the result is directly the
    # lane-dense (1, tile_b) output row — no 1-of-128-lane masked stores.
    logits = jax.lax.dot_general(
        w4_ref[...], h.astype(jnp.float32), (((1,), (1,)), ((), ())),
        preferred_element_type=jnp.float32)          # (1, tile_b)
    logits = logits + b4_ref[...]                    # (1, 1) broadcasts over lanes
    # Sigmoid: exp on the EUP, divide replaced by approx reciprocal (also EUP).
    probs = pl.reciprocal(1.0 + jnp.exp(-logits), approx=True)
    o_ref[...] = probs.astype(o_ref.dtype)


def _round_up(n, m):
    return ((n + m - 1) // m) * m


def _epilogue_dtype():
    """bf16 VALU epilogue on TPU v6 (Trillium) and newer; f32 on v5e and older."""
    try:
        kind = jax.devices()[0].device_kind
        m = re.search(r"(\d+)", kind)
        if m is not None and int(m.group(1)) >= 6:
            return jnp.bfloat16
    except Exception:
        pass
    return jnp.float32


def mlp_forward(x, params, *, tile_b=2048, epilogue_dtype=None):
    """Fused MLP forward.

    x: (B, input_size) float32 or bfloat16 (bf16 halves the input HBM traffic).
    params: dict of W1..W4 with shape (in, out) and b1..b4 with shape (1, out).
    Returns (B, 1) float32.
    """
    B, Din = x.shape
    act_dtype = _epilogue_dtype() if epilogue_dtype is None else epilogue_dtype

    # Lane/MXU-friendly tiling: 128-aligned, large by default to amortize the
    # ~0.35us/step pipeline overhead, but capped so the 1-D parallel grid gets
    # >=2 steps whenever the batch allows (both v7x TensorCores stay busy).
    tile_b = _round_up(max(int(tile_b), 1), 128)
    tile = max(128, min(tile_b, _round_up(pl.cdiv(B, 2), 128)))
    grid = (pl.cdiv(B, tile),)   # ragged last block handled by Pallas masking

    # Matmul weights in bf16 (2x MXU throughput on v6e/v7x, half the weight
    # bytes). Biases live in the epilogue dtype; the tiny final-layer row and
    # its bias stay f32 (f32 final dot + sigmoid epilogue).
    w1 = params["W1"].astype(jnp.bfloat16)
    w2 = params["W2"].astype(jnp.bfloat16)
    w3 = params["W3"].astype(jnp.bfloat16)
    w4 = params["W4"].astype(jnp.float32).T          # (1, 32)
    b1 = params["b1"].astype(act_dtype)
    b2 = params["b2"].astype(act_dtype)
    b3 = params["b3"].astype(act_dtype)
    b4 = params["b4"].astype(jnp.float32)            # (1, 1)

    def full_spec(shape):
        # Grid-invariant parameter block: same (whole) tile every step, so
        # Pallas only DMAs it once.
        return pl.BlockSpec(shape, lambda i: (0,) * len(shape))

    # VMEM is tiny at the default tile; only raise the scoped limit for very
    # large tiles that would approach the 16/32 MiB defaults.
    itemsize_x = jnp.dtype(x.dtype).itemsize
    vmem_est = (2 * tile * Din * itemsize_x          # double-buffered input tile
                + tile * (128 + 64 + 32 + 2) * 4     # f32 intermediates + output
                + (1 << 20))                         # weights/biases + slack
    vmem_limit = None
    if vmem_est > 12 * 1024 * 1024:
        vmem_limit = min(2 * vmem_est, 64 * 1024 * 1024)   # stays <= v7x physical VMEM

    out = pl.pallas_call(
        partial(_mlp_kernel, act_dtype=act_dtype),
        out_shape=jax.ShapeDtypeStruct((1, B), jnp.float32),
        grid_spec=pltpu.PrefetchScalarGridSpec(
            num_scalar_prefetch=0,
            grid=grid,
            in_specs=[
                pl.BlockSpec((tile, Din), lambda i: (i, 0)),
                full_spec(w1.shape), full_spec(b1.shape),
                full_spec(w2.shape), full_spec(b2.shape),
                full_spec(w3.shape), full_spec(b3.shape),
                full_spec(w4.shape), full_spec(b4.shape),
            ],
            # Lane-dense output: one (1, tile) slab per grid step, batch in lanes.
            out_specs=pl.BlockSpec((1, tile), lambda i: (0, i)),
        ),
        # Batch tiles are independent -> shard across TensorCores (v7x megacore).
        compiler_params=pltpu.CompilerParams(
            dimension_semantics=("parallel",),
            vmem_limit_bytes=vmem_limit),
    )(x, w1, b1, w2, b2, w3, b3, w4, b4)

    return out[0, :, None]                           # back to (B, 1)


def init_params(key, input_size):
    """Deterministic init mimicking PyTorch Linear shapes (weights stored transposed)."""
    dims = [(input_size, 128), (128, 64), (64, 32), (32, 1)]
    params = {}
    for idx, (fan_in, fan_out) in enumerate(dims, start=1):
        key, kw, kb = jax.random.split(key, 3)
        bound = 1.0 / jnp.sqrt(fan_in)
        params[f"W{idx}"] = jax.random.uniform(
            kw, (fan_in, fan_out), jnp.float32, -bound, bound)
        params[f"b{idx}"] = jax.random.uniform(
            kb, (1, fan_out), jnp.float32, -bound, bound)
    return params


def _reference_matched(x, params, act_dtype):
    """Plain-JAX reference matching the kernel's numerics (exact sigmoid)."""
    h = x
    for i in (1, 2, 3):
        w = params[f"W{i}"].astype(jnp.bfloat16)
        h = jnp.dot(h.astype(jnp.bfloat16), w, preferred_element_type=jnp.float32)
        h = jnp.maximum(h.astype(act_dtype) + params[f"b{i}"].astype(act_dtype), 0.0)
    logits = jnp.dot(h.astype(jnp.float32), params["W4"]) + params["b4"]
    return 1.0 / (1.0 + jnp.exp(-logits))


def _reference_f32(x, params):
    """Full-f32 reference (the PyTorch module's semantics)."""
    h = x
    for i in (1, 2, 3):
        h = jnp.maximum(h @ params[f"W{i}"] + params[f"b{i}"], 0.0)
    return jax.nn.sigmoid(h @ params["W4"] + params["b4"])


if __name__ == "__main__":
    key = jax.random.PRNGKey(0)
    input_size = 32
    batch = 16

    kx, kp = jax.random.split(key)
    x = jax.random.normal(kx, (batch, input_size), jnp.float32)
    params = init_params(kp, input_size)
    act_dtype = _epilogue_dtype()

    y = jax.block_until_ready(mlp_forward(x, params))
    assert y.shape == (batch, 1)
    assert jnp.allclose(y, _reference_matched(x, params, act_dtype), atol=1e-2), \
        "mismatch (matched ref)"
    assert jnp.allclose(y, _reference_f32(x, params), atol=4e-2), "mismatch (f32 ref)"

    # Multi-step parallel grid + ragged (non-tile-aligned) last block, no jnp.pad pass.
    x2 = jax.random.normal(kx, (1000, input_size), jnp.float32)
    y2 = jax.block_until_ready(mlp_forward(x2, params, tile_b=512))
    assert y2.shape == (1000, 1)
    assert jnp.allclose(y2, _reference_matched(x2, params, act_dtype), atol=1e-2), \
        "mismatch (ragged batch)"

    # bf16 input path (halves input DMA bytes; in-kernel cast becomes a no-op).
    y3 = jax.block_until_ready(mlp_forward(x2.astype(jnp.bfloat16), params))
    assert y3.shape == (1000, 1)
    assert jnp.allclose(y3, _reference_f32(x2, params), atol=5e-2), "mismatch (bf16 input)"

    print("KERNEL_OK")
</pallas_src>

<mosaic_0001>
module attributes {stable_mosaic.version = 11 : i64} {
  func.func @_mlp_kernel(%arg0: i32, %arg1: memref<128x32xf32, #tpu.memory_space<vmem>>, %arg2: memref<32x128xbf16, #tpu.memory_space<vmem>>, %arg3: memref<1x128xf32, #tpu.memory_space<vmem>>, %arg4: memref<128x64xbf16, #tpu.memory_space<vmem>>, %arg5: memref<1x64xf32, #tpu.memory_space<vmem>>, %arg6: memref<64x32xbf16, #tpu.memory_space<vmem>>, %arg7: memref<1x32xf32, #tpu.memory_space<vmem>>, %arg8: memref<1x32xf32, #tpu.memory_space<vmem>>, %arg9: memref<1x1xf32, #tpu.memory_space<vmem>>, %arg10: memref<1x128xf32, #tpu.memory_space<vmem>>) attributes {dimension_semantics = [#tpu.dimension_semantics<parallel>], iteration_bounds = array<i64: 1>, scalar_prefetch = 0 : i64, scratch_operands = 0 : i64, tpu.core_type = #tpu.core_type<tc>, window_params = [{transform_indices = @transform_0, window_bounds = array<i64: 128, 32>}, {pipeline_mode = #tpu.pipeline_mode<synchronous>, transform_indices = @transform_1, window_bounds = array<i64: 32, 128>}, {pipeline_mode = #tpu.pipeline_mode<synchronous>, transform_indices = @transform_2, window_bounds = array<i64: 1, 128>}, {pipeline_mode = #tpu.pipeline_mode<synchronous>, transform_indices = @transform_3, window_bounds = array<i64: 128, 64>}, {pipeline_mode = #tpu.pipeline_mode<synchronous>, transform_indices = @transform_4, window_bounds = array<i64: 1, 64>}, {pipeline_mode = #tpu.pipeline_mode<synchronous>, transform_indices = @transform_5, window_bounds = array<i64: 64, 32>}, {pipeline_mode = #tpu.pipeline_mode<synchronous>, transform_indices = @transform_6, window_bounds = array<i64: 1, 32>}, {pipeline_mode = #tpu.pipeline_mode<synchronous>, transform_indices = @transform_7, window_bounds = array<i64: 1, 32>}, {pipeline_mode = #tpu.pipeline_mode<synchronous>, transform_indices = @transform_8, window_bounds = array<i64: 1, 1>}, {transform_indices = @transform_9, window_bounds = array<i64: 1, 128>}]} {
    %c0 = arith.constant 0 : index
    %c0_0 = arith.constant 0 : index
    %0 = vector.load %arg1[%c0, %c0_0] : memref<128x32xf32, #tpu.memory_space<vmem>>, vector<128x32xf32>
    %1 = arith.truncf %0 : vector<128x32xf32> to vector<128x32xbf16>
    %c0_1 = arith.constant 0 : index
    %c0_2 = arith.constant 0 : index
    %2 = vector.load %arg2[%c0_1, %c0_2] : memref<32x128xbf16, #tpu.memory_space<vmem>>, vector<32x128xbf16>
    %cst = arith.constant dense<0.000000e+00> : vector<128x128xf32>
    %3 = tpu.matmul %1, %2, %cst {dimension_numbers = #tpu.dot_dimension_numbers<[1], [0], [0], [1], [0, 0, 1, 1], [], []>} : vector<128x32xbf16>, vector<32x128xbf16>, vector<128x128xf32> -> vector<128x128xf32>
    %c0_3 = arith.constant 0 : index
    %c0_4 = arith.constant 0 : index
    %4 = vector.load %arg3[%c0_3, %c0_4] : memref<1x128xf32, #tpu.memory_space<vmem>>, vector<1x128xf32>
    %5 = vector.broadcast %4 : vector<1x128xf32> to vector<128x128xf32>
    %6 = arith.addf %3, %5 : vector<128x128xf32>
    %cst_5 = arith.constant 0.000000e+00 : f32
    %7 = vector.broadcast %cst_5 : f32 to vector<128x128xf32>
    %8 = arith.maximumf %6, %7 : vector<128x128xf32>
    %9 = arith.truncf %8 : vector<128x128xf32> to vector<128x128xbf16>
    %c0_6 = arith.constant 0 : index
    %c0_7 = arith.constant 0 : index
    %10 = vector.load %arg4[%c0_6, %c0_7] : memref<128x64xbf16, #tpu.memory_space<vmem>>, vector<128x64xbf16>
    %cst_8 = arith.constant dense<0.000000e+00> : vector<128x64xf32>
    %11 = tpu.matmul %9, %10, %cst_8 {dimension_numbers = #tpu.dot_dimension_numbers<[1], [0], [0], [1], [0, 0, 1, 1], [], []>} : vector<128x128xbf16>, vector<128x64xbf16>, vector<128x64xf32> -> vector<128x64xf32>
    %c0_9 = arith.constant 0 : index
    %c0_10 = arith.constant 0 : index
    %12 = vector.load %arg5[%c0_9, %c0_10] : memref<1x64xf32, #tpu.memory_space<vmem>>, vector<1x64xf32>
    %13 = vector.broadcast %12 : vector<1x64xf32> to vector<128x64xf32>
    %14 = arith.addf %11, %13 : vector<128x64xf32>
    %cst_11 = arith.constant 0.000000e+00 : f32
    %15 = vector.broadcast %cst_11 : f32 to vector<128x64xf32>
    %16 = arith.maximumf %14, %15 : vector<128x64xf32>
    %17 = arith.truncf %16 : vector<128x64xf32> to vector<128x64xbf16>
    %c0_12 = arith.constant 0 : index
    %c0_13 = arith.constant 0 : index
    %18 = vector.load %arg6[%c0_12, %c0_13] : memref<64x32xbf16, #tpu.memory_space<vmem>>, vector<64x32xbf16>
    %cst_14 = arith.constant dense<0.000000e+00> : vector<128x32xf32>
    %19 = tpu.matmul %17, %18, %cst_14 {dimension_numbers = #tpu.dot_dimension_numbers<[1], [0], [0], [1], [0, 0, 1, 1], [], []>} : vector<128x64xbf16>, vector<64x32xbf16>, vector<128x32xf32> -> vector<128x32xf32>
    %c0_15 = arith.constant 0 : index
    %c0_16 = arith.constant 0 : index
    %20 = vector.load %arg7[%c0_15, %c0_16] : memref<1x32xf32, #tpu.memory_space<vmem>>, vector<1x32xf32>
    %21 = vector.broadcast %20 : vector<1x32xf32> to vector<128x32xf32>
    %22 = arith.addf %19, %21 : vector<128x32xf32>
    %cst_17 = arith.constant 0.000000e+00 : f32
    %23 = vector.broadcast %cst_17 : f32 to vector<128x32xf32>
    %24 = arith.maximumf %22, %23 : vector<128x32xf32>
    %c0_18 = arith.constant 0 : index
    %c0_19 = arith.constant 0 : index
    %25 = vector.load %arg8[%c0_18, %c0_19] : memref<1x32xf32, #tpu.memory_space<vmem>>, vector<1x32xf32>
    %cst_20 = arith.constant dense<0.000000e+00> : vector<1x128xf32>
    %26 = tpu.matmul %25, %24, %cst_20 {dimension_numbers = #tpu.dot_dimension_numbers<[1], [1], [0], [0], [0, 0, 1, 0], [], []>} : vector<1x32xf32>, vector<128x32xf32>, vector<1x128xf32> -> vector<1x128xf32>
    %c0_21 = arith.constant 0 : index
    %c0_22 = arith.constant 0 : index
    %27 = vector.load %arg9[%c0_21, %c0_22] : memref<1x1xf32, #tpu.memory_space<vmem>>, vector<1x1xf32>
    %28 = vector.broadcast %27 : vector<1x1xf32> to vector<1x128xf32>
    %29 = arith.addf %26, %28 : vector<1x128xf32>
    %cst_23 = arith.constant 0.000000e+00 : f32
    %30 = vector.broadcast %cst_23 : f32 to vector<1x128xf32>
    %31 = arith.subf %30, %29 : vector<1x128xf32>
    %32 = math.exp %31 : vector<1x128xf32>
    %cst_24 = arith.constant 1.000000e+00 : f32
    %33 = vector.broadcast %cst_24 : f32 to vector<1x128xf32>
    %34 = arith.addf %33, %32 : vector<1x128xf32>
    %35 = tpu.reciprocal %34 {approx = true} : vector<1x128xf32> -> vector<1x128xf32>
    %c0_25 = arith.constant 0 : index
    %c0_26 = arith.constant 0 : index
    %36 = vector.load %arg10[%c0_25, %c0_26] : memref<1x128xf32, #tpu.memory_space<vmem>>, vector<1x128xf32>
    tpu.vector_store %arg10[%c0_25, %c0_26], %35 {strides = array<i32>} : memref<1x128xf32, #tpu.memory_space<vmem>>, vector<1x128xf32>,
    return
  }
  func.func @transform_0(%arg0: i32) -> (i32, i32) {
    %c0_i32 = arith.constant 0 : i32
    %c0_i32_0 = arith.constant 0 : i32
    return %arg0, %c0_i32 : i32, i32
  }
  func.func @transform_1(%arg0: i32) -> (i32, i32) {
    %c0_i32 = arith.constant 0 : i32
    %c0_i32_0 = arith.constant 0 : i32
    %c0_i32_1 = arith.constant 0 : i32
    return %c0_i32, %c0_i32_0 : i32, i32
  }
  func.func @transform_2(%arg0: i32) -> (i32, i32) {
    %c0_i32 = arith.constant 0 : i32
    %c0_i32_0 = arith.constant 0 : i32
    %c0_i32_1 = arith.constant 0 : i32
    return %c0_i32, %c0_i32_0 : i32, i32
  }
  func.func @transform_3(%arg0: i32) -> (i32, i32) {
    %c0_i32 = arith.constant 0 : i32
    %c0_i32_0 = arith.constant 0 : i32
    %c0_i32_1 = arith.constant 0 : i32
    return %c0_i32, %c0_i32_0 : i32, i32
  }
  func.func @transform_4(%arg0: i32) -> (i32, i32) {
    %c0_i32 = arith.constant 0 : i32
    %c0_i32_0 = arith.constant 0 : i32
    %c0_i32_1 = arith.constant 0 : i32
    return %c0_i32, %c0_i32_0 : i32, i32
  }
  func.func @transform_5(%arg0: i32) -> (i32, i32) {
    %c0_i32 = arith.constant 0 : i32
    %c0_i32_0 = arith.constant 0 : i32
    %c0_i32_1 = arith.constant 0 : i32
    return %c0_i32, %c0_i32_0 : i32, i32
  }
  func.func @transform_6(%arg0: i32) -> (i32, i32) {
    %c0_i32 = arith.constant 0 : i32
    %c0_i32_0 = arith.constant 0 : i32
    %c0_i32_1 = arith.constant 0 : i32
    return %c0_i32, %c0_i32_0 : i32, i32
  }
  func.func @transform_7(%arg0: i32) -> (i32, i32) {
    %c0_i32 = arith.constant 0 : i32
    %c0_i32_0 = arith.constant 0 : i32
    %c0_i32_1 = arith.constant 0 : i32
    return %c0_i32, %c0_i32_0 : i32, i32
  }
  func.func @transform_8(%arg0: i32) -> (i32, i32) {
    %c0_i32 = arith.constant 0 : i32
    %c0_i32_0 = arith.constant 0 : i32
    %c0_i32_1 = arith.constant 0 : i32
    return %c0_i32, %c0_i32_0 : i32, i32
  }
  func.func @transform_9(%arg0: i32) -> (i32, i32) {
    %c0_i32 = arith.constant 0 : i32
    %c0_i32_0 = arith.constant 0 : i32
    return %c0_i32, %arg0 : i32, i32
  }
}

</mosaic_0001>

<llo_original>
// kernel: tpu_custom_call.1
$region0: #{tpu_custom_call.1}
  #allocation0 [shape = 'u32[]', space=smem, size = 0x4, offset = 0x4, fixed_abs, tag = 'smem constant byte address 0x4 - core index']
  #allocation1 [shape = 'u32[144,128]{1,0:T(1,128)}', space=vmem, size = 0x12000, scoped, tag = 'internal scratch']
  #allocation2 [shape = 'f32[1,1]{1,0:T(1,128)S(1)}', space=vmem, size = 0x200, scoped, tag = 'scoped memory for tpu_custom_call.1']
  %s0 = inlined_call_operand.vmem [shape: f32[16,32], index: 0, kind: input, shape index: {}]
  %s1 = inlined_call_operand.vmem [shape: bf16[32,128], index: 1, kind: input, shape index: {}]
  %s2 = inlined_call_operand.vmem [shape: f32[1,128], index: 2, kind: input, shape index: {}]
  %s3 = inlined_call_operand.vmem [shape: bf16[128,64], index: 3, kind: input, shape index: {}]
  %s4 = inlined_call_operand.vmem [shape: f32[1,64], index: 4, kind: input, shape index: {}]
  %s5 = inlined_call_operand.vmem [shape: bf16[64,32], index: 5, kind: input, shape index: {}]
  %s6 = inlined_call_operand.vmem [shape: f32[1,32], index: 6, kind: input, shape index: {}]
  %s7 = inlined_call_operand.vmem [shape: f32[1,32], index: 7, kind: input, shape index: {}]
  %s8 = inlined_call_operand.<no memory space> [shape: f32[1,1], index: 8, kind: input, shape index: {}]
  %s9 = inlined_call_operand.hbm [shape: f32[1,16], index: 9, kind: output, shape index: {}]
  %s10 = sld [smem:[#allocation0]]
  $region46: #{tpu_custom_call.1} parent=0
    _
  %s12 = ssub.s32 1, %s10
  %s13 = scalar_select 0, %s12, %s10
  %v14 = vstv %s8
  %15 = vst [vmem:[#allocation2] sm:$0x1] %v14
  $region1: #{tpu_custom_call.1} parent=0
    #allocation3 [shape = 'u8[512]{0}', space=vmem, size = 0x400, scoped, tag = 'output window, operand 0, single buffered']
    #allocation4 [shape = 's32[1]{0}', space=sflag, size = 0x4, scoped, tag = 'scoped memory for tpu_custom_call.1']
    %16 = vsyncpa [#allocation4], 0
    // Predicated region
    $region2: #{tpu_custom_call.1} parent=1 // pred_check
      _
    $region3: #{tpu_custom_call.1} parent=1 // pred_check_branch
      %18 = sbr.rel (0) target = $region5
    $region4: #{tpu_custom_call.1} parent=1 // pred_region
      _
    $region5: #{tpu_custom_call.1} parent=1 // pred_fallthru
      _
    // Predicated region
    $region6: #{tpu_custom_call.1} parent=1 // pred_check
      _
    $region7: #{tpu_custom_call.1} parent=1 // pred_check_branch
      %20 = sbr.rel (0) target = $region9
    $region8: #{tpu_custom_call.1} parent=1 // pred_region
      _
    $region9: #{tpu_custom_call.1} parent=1 // pred_fallthru
      _
    // Predicated region
    $region10: #{tpu_custom_call.1} parent=1 // pred_check
      _
    $region11: #{tpu_custom_call.1} parent=1 // pred_check_branch
      %22 = sbr.rel (0) target = $region13
    $region12: #{tpu_custom_call.1} parent=1 // pred_region
      _
    $region13: #{tpu_custom_call.1} parent=1 // pred_fallthru
      _
    // Predicated region
    $region14: #{tpu_custom_call.1} parent=1 // pred_check
      _
    $region15: #{tpu_custom_call.1} parent=1 // pred_check_branch
      %24 = sbr.rel (0) target = $region17
    $region16: #{tpu_custom_call.1} parent=1 // pred_region
      _
    $region17: #{tpu_custom_call.1} parent=1 // pred_fallthru
      _
    // Predicated region
    $region18: #{tpu_custom_call.1} parent=1 // pred_check
      _
    $region19: #{tpu_custom_call.1} parent=1 // pred_check_branch
      %26 = sbr.rel (0) target = $region21
    $region20: #{tpu_custom_call.1} parent=1 // pred_region
      _
    $region21: #{tpu_custom_call.1} parent=1 // pred_fallthru
      _
    // Predicated region
    $region22: #{tpu_custom_call.1} parent=1 // pred_check
      _
    $region23: #{tpu_custom_call.1} parent=1 // pred_check_branch
      %28 = sbr.rel (0) target = $region25
    $region24: #{tpu_custom_call.1} parent=1 // pred_region
      _
    $region25: #{tpu_custom_call.1} parent=1 // pred_fallthru
      _
    // Predicated region
    $region26: #{tpu_custom_call.1} parent=1 // pred_check
      _
    $region27: #{tpu_custom_call.1} parent=1 // pred_check_branch
      %30 = sbr.rel (0) target = $region29
    $region28: #{tpu_custom_call.1} parent=1 // pred_region
      _
    $region29: #{tpu_custom_call.1} parent=1 // pred_fallthru
      _
    // Predicated region
    $region30: #{tpu_custom_call.1} parent=1 // pred_check
      _
    $region31: #{tpu_custom_call.1} parent=1 // pred_check_branch
      %32 = sbr.rel (0) target = $region33
    $region32: #{tpu_custom_call.1} parent=1 // pred_region
      _
    $region33: #{tpu_custom_call.1} parent=1 // pred_fallthru
      _
    // Predicated region
    $region34: #{tpu_custom_call.1} parent=1 // pred_check
      _
    $region35: #{tpu_custom_call.1} parent=1 // pred_check_branch
      %34 = sbr.rel (0) target = $region37
    $region36: #{tpu_custom_call.1} parent=1 // pred_region
      _
    $region37: #{tpu_custom_call.1} parent=1 // pred_fallthru
      _
    %v36 = vld [vmem:[%s0] sm:$0xff]
    %v37 = vld [vmem:[%s0 + $0x8] sm:$0xff]
    %v38 = vld [vmem:[%s0 + $0x10] sm:$0xff]
    %v39 = vld [vmem:[%s0 + $0x18] sm:$0xff]
    %v40 = vld [vmem:[%s0 + $0x20] sm:$0xff]
    %v41 = vld [vmem:[%s0 + $0x28] sm:$0xff]
    %v42 = vld [vmem:[%s0 + $0x30] sm:$0xff]
    %v43 = vld [vmem:[%s0 + $0x38] sm:$0xff]
    %v44 = vld [vmem:[%s0 + $0x40] sm:$0xff]
    %v45 = vld [vmem:[%s0 + $0x48] sm:$0xff]
    %v46 = vld [vmem:[%s0 + $0x50] sm:$0xff]
    %v47 = vld [vmem:[%s0 + $0x58] sm:$0xff]
    %v48 = vld [vmem:[%s0 + $0x60] sm:$0xff]
    %v49 = vld [vmem:[%s0 + $0x68] sm:$0xff]
    %v50 = vld [vmem:[%s0 + $0x70] sm:$0xff]
    %v51 = vld [vmem:[%s0 + $0x78] sm:$0xff]
    %v52 = vpack.c.bf16 %v37, %v36
    %v53 = vpack.c.bf16 %v39, %v38
    %v54 = vpack.c.bf16 %v41, %v40
    %v55 = vpack.c.bf16 %v43, %v42
    %v56 = vpack.c.bf16 %v45, %v44
    %v57 = vpack.c.bf16 %v47, %v46
    %v58 = vpack.c.bf16 %v49, %v48
    %v59 = vpack.c.bf16 %v51, %v50
    %v60 = vld [vmem:[%s1] sm:$0xf]
    %v61 = vld [vmem:[%s1 + $0x4] sm:$0xf]
    %v62 = vld [vmem:[%s1 + $0x8] sm:$0xf]
    %v63 = vld [vmem:[%s1 + $0xc] sm:$0xf]
    %v64 = vld [vmem:[%s2] sm:$0x1]
    %v66 = vlaneseq
    %v67 = vshrl.u32 %v66, 7
    %v68 = vsub.s32 0, %v67
    %v69 = vrot.slane %v64, %v68
    %v75 = vunpack.c.l.b16 %v60
    %v76 = vunpack.c.l.b16 %v61
    %v77 = vunpack.c.l.b16 %v62
    %v78 = vunpack.c.l.b16 %v63
    %v79 = vpack.c.b16 %v76, %v75
    %v80 = vpack.c.b16 %v78, %v77
    %vm83 = vcmask 261120
    %v85 = vsel %vm83, %v52, 0
    %v88 = vsel %vm83, %v53, 0
    %v91 = vsel %vm83, %v54, 0
    %v94 = vsel %vm83, %v55, 0
    %v97 = vsel %vm83, %v56, 0
    %v100 = vsel %vm83, %v57, 0
    %v103 = vsel %vm83, %v58, 0
    %v106 = vsel %vm83, %v59, 0
    %108 = vmatprep.subr.bf16.mxu0 0
    %109 = vmatpush1.bf16.msra.mxu0 %v79
    %110 = vmatprep.subr.bf16.mxu0 0
    %111 = vmatpush1.bf16.msra.mxu0 %v80
    %112 = vmatprep.subr.bf16.mxu0 0
    %113 = vmatpush1.bf16.msra.mxu0 0
    %114 = vmatprep.subr.bf16.mxu0 0
    %115 = vmatpush1.bf16.msra.mxu0 0
    %116 = vmatprep.subr.bf16.mxu0 0
    %117 = vmatpush1.bf16.msra.mxu0 0
    %118 = vmatprep.subr.bf16.mxu0 0
    %119 = vmatpush1.bf16.msra.mxu0 0
    %120 = vmatprep.subr.bf16.mxu0 0
    %121 = vmatpush1.bf16.msra.mxu0 0
    %122 = vmatprep.subr.bf16.mxu0 0
    %123 = vmatpush1.bf16.msra.mxu0 0
    %124 = vmatprep.subr.bf16.mxu0 0
    %125 = vmatpush1.bf16.msra.mxu0 0
    %126 = vmatprep.subr.bf16.mxu0 0
    %127 = vmatpush1.bf16.msra.mxu0 0
    %128 = vmatprep.subr.bf16.mxu0 0
    %129 = vmatpush1.bf16.msra.mxu0 0
    %130 = vmatprep.subr.bf16.mxu0 0
    %131 = vmatpush1.bf16.msra.mxu0 0
    %132 = vmatprep.subr.bf16.mxu0 0
    %133 = vmatpush1.bf16.msra.mxu0 0
    %134 = vmatprep.subr.bf16.mxu0 0
    %135 = vmatpush1.bf16.msra.mxu0 0
    %136 = vmatprep.subr.bf16.mxu0 0
    %137 = vmatpush1.bf16.msra.mxu0 0
    %138 = vmatprep.subr.bf16.mxu0 0
    %139 = vmatpush1.bf16.msra.mxu0 0
    %140 = vmatprep.mubr.bf16.mxu0 0
    %141 = vmatmul.mubr.bf16.gmra.mrb[0].mxu0 %v85
    %v142 = vpop.f32.mrb[0].mxu0
    %v143 = vadd.f32 %v69, %v142
    %v144 = vpop.f32.mrb[0].mxu0
    %v145 = vpop.f32.mrb[0].mxu0
    %v146 = vadd.f32 %v69, %v145
    %v147 = vpop.f32.mrb[0].mxu0
    %148 = vmatprep.mubr.bf16.mxu0 0
    %149 = vmatmul.mubr.bf16.gmra.mrb[0].mxu0 %v88
    %v150 = vpop.f32.mrb[0].mxu0
    %v151 = vadd.f32 %v69, %v150
    %v152 = vpop.f32.mrb[0].mxu0
    %v153 = vpop.f32.mrb[0].mxu0
    %v154 = vadd.f32 %v69, %v153
    %v155 = vpop.f32.mrb[0].mxu0
    %156 = vmatprep.mubr.bf16.mxu0 0
    %157 = vmatmul.mubr.bf16.gmra.mrb[0].mxu0 %v91
    %v158 = vpop.f32.mrb[0].mxu0
    %v159 = vadd.f32 %v69, %v158
    %v160 = vpop.f32.mrb[0].mxu0
    %v161 = vpop.f32.mrb[0].mxu0
    %v162 = vadd.f32 %v69, %v161
    %v163 = vpop.f32.mrb[0].mxu0
    %164 = vmatprep.mubr.bf16.mxu0 0
    %165 = vmatmul.mubr.bf16.gmra.mrb[0].mxu0 %v94
    %v166 = vpop.f32.mrb[0].mxu0
    %v167 = vadd.f32 %v69, %v166
    %v168 = vpop.f32.mrb[0].mxu0
    %v169 = vpop.f32.mrb[0].mxu0
    %v170 = vadd.f32 %v69, %v169
    %v171 = vpop.f32.mrb[0].mxu0
    %172 = vmatprep.mubr.bf16.mxu0 0
    %173 = vmatmul.mubr.bf16.gmra.mrb[0].mxu0 %v97
    %v174 = vpop.f32.mrb[0].mxu0
    %v175 = vadd.f32 %v69, %v174
    %v176 = vpop.f32.mrb[0].mxu0
    %v177 = vpop.f32.mrb[0].mxu0
    %v178 = vadd.f32 %v69, %v177
    %v179 = vpop.f32.mrb[0].mxu0
    %180 = vmatprep.mubr.bf16.mxu0 0
    %181 = vmatmul.mubr.bf16.gmra.mrb[0].mxu0 %v100
    %v182 = vpop.f32.mrb[0].mxu0
    %v183 = vadd.f32 %v69, %v182
    %v184 = vpop.f32.mrb[0].mxu0
    %v185 = vpop.f32.mrb[0].mxu0
    %v186 = vadd.f32 %v69, %v185
    %v187 = vpop.f32.mrb[0].mxu0
    %188 = vmatprep.mubr.bf16.mxu0 0
    %189 = vmatmul.mubr.bf16.gmra.mrb[0].mxu0 %v103
    %v190 = vpop.f32.mrb[0].mxu0
    %v191 = vadd.f32 %v69, %v190
    %v192 = vpop.f32.mrb[0].mxu0
    %v193 = vpop.f32.mrb[0].mxu0
    %v194 = vadd.f32 %v69, %v193
    %v195 = vpop.f32.mrb[0].mxu0
    %196 = vmatprep.mubr.bf16.mxu0 0
    %197 = vmatmul.mubr.bf16.gmra.mrb[0].mxu0 %v106
    %v198 = vpop.f32.mrb[0].mxu0
    %v199 = vadd.f32 %v69, %v198
    %v200 = vpop.f32.mrb[0].mxu0
    %v201 = vpop.f32.mrb[0].mxu0
    %v202 = vadd.f32 %v69, %v201
    %v203 = vpop.f32.mrb[0].mxu0
    %204 = vdwg.mxu0
    %v205 = vmax.f32 %v143, 0.0
    %v206 = vmax.f32 %v146, 0.0
    %v207 = vmax.f32 %v151, 0.0
    %v208 = vmax.f32 %v154, 0.0
    %v209 = vmax.f32 %v159, 0.0
    %v210 = vmax.f32 %v162, 0.0
    %v211 = vmax.f32 %v167, 0.0
    %v212 = vmax.f32 %v170, 0.0
    %v213 = vmax.f32 %v175, 0.0
    %v214 = vmax.f32 %v178, 0.0
    %v215 = vmax.f32 %v183, 0.0
    %v216 = vmax.f32 %v186, 0.0
    %v217 = vmax.f32 %v191, 0.0
    %v218 = vmax.f32 %v194, 0.0
    %v219 = vmax.f32 %v199, 0.0
    %v220 = vmax.f32 %v202, 0.0
    %v221 = vpack.c.bf16 %v206, %v205
    %v222 = vpack.c.bf16 %v208, %v207
    %v223 = vpack.c.bf16 %v210, %v209
    %v224 = vpack.c.bf16 %v212, %v211
    %v225 = vpack.c.bf16 %v214, %v213
    %v226 = vpack.c.bf16 %v216, %v215
    %v227 = vpack.c.bf16 %v218, %v217
    %v228 = vpack.c.bf16 %v220, %v219
    %v229 = vld [vmem:[%s3] sm:$0xf]
    %v230 = vld [vmem:[%s3 + $0x4] sm:$0xf]
    %v231 = vld [vmem:[%s3 + $0x8] sm:$0xf]
    %v232 = vld [vmem:[%s3 + $0xc] sm:$0xf]
    %v233 = vld [vmem:[%s3 + $0x10] sm:$0xf]
    %v234 = vld [vmem:[%s3 + $0x14] sm:$0xf]
    %v235 = vld [vmem:[%s3 + $0x18] sm:$0xf]
    %v236 = vld [vmem:[%s3 + $0x1c] sm:$0xf]
    %v237 = vld [vmem:[%s3 + $0x20] sm:$0xf]
    %v238 = vld [vmem:[%s3 + $0x24] sm:$0xf]
    %v239 = vld [vmem:[%s3 + $0x28] sm:$0xf]
    %v240 = vld [vmem:[%s3 + $0x2c] sm:$0xf]
    %v241 = vld [vmem:[%s3 + $0x30] sm:$0xf]
    %v242 = vld [vmem:[%s3 + $0x34] sm:$0xf]
    %v243 = vld [vmem:[%s3 + $0x38] sm:$0xf]
    %v244 = vld [vmem:[%s3 + $0x3c] sm:$0xf]
    %v245 = vld [vmem:[%s4] sm:$0x1]
    %v247 = vlaneseq
    %v248 = vshrl.u32 %v247, 7
    %v249 = vsub.s32 0, %v248
    %v250 = vrot.slane %v245, %v249
    %v268 = vunpack.c.l.b16 %v229
    %v269 = vunpack.c.l.b16 %v230
    %v270 = vunpack.c.l.b16 %v231
    %v271 = vunpack.c.l.b16 %v232
    %v272 = vunpack.c.l.b16 %v233
    %v273 = vunpack.c.l.b16 %v234
    %v274 = vunpack.c.l.b16 %v235
    %v275 = vunpack.c.l.b16 %v236
    %v276 = vunpack.c.l.b16 %v237
    %v277 = vunpack.c.l.b16 %v238
    %v278 = vunpack.c.l.b16 %v239
    %v279 = vunpack.c.l.b16 %v240
    %v280 = vunpack.c.l.b16 %v241
    %v281 = vunpack.c.l.b16 %v242
    %v282 = vunpack.c.l.b16 %v243
    %v283 = vunpack.c.l.b16 %v244
    %v284 = vpack.c.b16 %v269, %v268
    %v285 = vpack.c.b16 %v271, %v270
    %v286 = vpack.c.b16 %v273, %v272
    %v287 = vpack.c.b16 %v275, %v274
    %v288 = vpack.c.b16 %v277, %v276
    %v289 = vpack.c.b16 %v279, %v278
    %v290 = vpack.c.b16 %v281, %v280
    %v291 = vpack.c.b16 %v283, %v282
    %300 = vmatprep.subr.bf16.mxu0 0
    %301 = vmatpush1.bf16.msra.mxu0 %v284
    %302 = vmatprep.subr.bf16.mxu0 0
    %303 = vmatpush1.bf16.msra.mxu0 %v285
    %304 = vmatprep.subr.bf16.mxu0 0
    %305 = vmatpush1.bf16.msra.mxu0 %v286
    %306 = vmatprep.subr.bf16.mxu0 0
    %307 = vmatpush1.bf16.msra.mxu0 %v287
    %308 = vmatprep.subr.bf16.mxu0 0
    %309 = vmatpush1.bf16.msra.mxu0 %v288
    %310 = vmatprep.subr.bf16.mxu0 0
    %311 = vmatpush1.bf16.msra.mxu0 %v289
    %312 = vmatprep.subr.bf16.mxu0 0
    %313 = vmatpush1.bf16.msra.mxu0 %v290
    %314 = vmatprep.subr.bf16.mxu0 0
    %315 = vmatpush1.bf16.msra.mxu0 %v291
    %316 = vmatprep.subr.bf16.mxu0 0
    %317 = vmatpush1.bf16.msra.mxu0 0
    %318 = vmatprep.subr.bf16.mxu0 0
    %319 = vmatpush1.bf16.msra.mxu0 0
    %320 = vmatprep.subr.bf16.mxu0 0
    %321 = vmatpush1.bf16.msra.mxu0 0
    %322 = vmatprep.subr.bf16.mxu0 0
    %323 = vmatpush1.bf16.msra.mxu0 0
    %324 = vmatprep.subr.bf16.mxu0 0
    %325 = vmatpush1.bf16.msra.mxu0 0
    %326 = vmatprep.subr.bf16.mxu0 0
    %327 = vmatpush1.bf16.msra.mxu0 0
    %328 = vmatprep.subr.bf16.mxu0 0
    %329 = vmatpush1.bf16.msra.mxu0 0
    %330 = vmatprep.subr.bf16.mxu0 0
    %331 = vmatpush1.bf16.msra.mxu0 0
    %332 = vmatprep.mubr.bf16.mxu0 0
    %333 = vmatmul.mubr.bf16.gmra.mrb[0].mxu0 %v221
    %v334 = vpop.f32.mrb[0].mxu0
    %v335 = vadd.f32 %v250, %v334
    %v336 = vpop.f32.mrb[0].mxu0
    %v337 = vpop.f32.mrb[0].mxu0
    %v338 = vadd.f32 %v250, %v337
    %v339 = vpop.f32.mrb[0].mxu0
    %340 = vmatprep.mubr.bf16.mxu0 0
    %341 = vmatmul.mubr.bf16.gmra.mrb[0].mxu0 %v222
    %v342 = vpop.f32.mrb[0].mxu0
    %v343 = vadd.f32 %v250, %v342
    %v344 = vpop.f32.mrb[0].mxu0
    %v345 = vpop.f32.mrb[0].mxu0
    %v346 = vadd.f32 %v250, %v345
    %v347 = vpop.f32.mrb[0].mxu0
    %348 = vmatprep.mubr.bf16.mxu0 0
    %349 = vmatmul.mubr.bf16.gmra.mrb[0].mxu0 %v223
    %v350 = vpop.f32.mrb[0].mxu0
    %v351 = vadd.f32 %v250, %v350
    %v352 = vpop.f32.mrb[0].mxu0
    %v353 = vpop.f32.mrb[0].mxu0
    %v354 = vadd.f32 %v250, %v353
    %v355 = vpop.f32.mrb[0].mxu0
    %356 = vmatprep.mubr.bf16.mxu0 0
    %357 = vmatmul.mubr.bf16.gmra.mrb[0].mxu0 %v224
    %v358 = vpop.f32.mrb[0].mxu0
    %v359 = vadd.f32 %v250, %v358
    %v360 = vpop.f32.mrb[0].mxu0
    %v361 = vpop.f32.mrb[0].mxu0
    %v362 = vadd.f32 %v250, %v361
    %v363 = vpop.f32.mrb[0].mxu0
    %364 = vmatprep.mubr.bf16.mxu0 0
    %365 = vmatmul.mubr.bf16.gmra.mrb[0].mxu0 %v225
    %v366 = vpop.f32.mrb[0].mxu0
    %v367 = vadd.f32 %v250, %v366
    %v368 = vpop.f32.mrb[0].mxu0
    %v369 = vpop.f32.mrb[0].mxu0
    %v370 = vadd.f32 %v250, %v369
    %v371 = vpop.f32.mrb[0].mxu0
    %372 = vmatprep.mubr.bf16.mxu0 0
    %373 = vmatmul.mubr.bf16.gmra.mrb[0].mxu0 %v226
    %v374 = vpop.f32.mrb[0].mxu0
    %v375 = vadd.f32 %v250, %v374
    %v376 = vpop.f32.mrb[0].mxu0
    %v377 = vpop.f32.mrb[0].mxu0
    %v378 = vadd.f32 %v250, %v377
    %v379 = vpop.f32.mrb[0].mxu0
    %380 = vmatprep.mubr.bf16.mxu0 0
    %381 = vmatmul.mubr.bf16.gmra.mrb[0].mxu0 %v227
    %v382 = vpop.f32.mrb[0].mxu0
    %v383 = vadd.f32 %v250, %v382
    %v384 = vpop.f32.mrb[0].mxu0
    %v385 = vpop.f32.mrb[0].mxu0
    %v386 = vadd.f32 %v250, %v385
    %v387 = vpop.f32.mrb[0].mxu0
    %388 = vmatprep.mubr.bf16.mxu0 0
    %389 = vmatmul.mubr.bf16.gmra.mrb[0].mxu0 %v228
    %v390 = vpop.f32.mrb[0].mxu0
    %v391 = vadd.f32 %v250, %v390
    %v392 = vpop.f32.mrb[0].mxu0
    %v393 = vpop.f32.mrb[0].mxu0
    %v394 = vadd.f32 %v250, %v393
    %v395 = vpop.f32.mrb[0].mxu0
    %396 = vdwg.mxu0
    %v397 = vmax.f32 %v335, 0.0
    %v398 = vmax.f32 %v338, 0.0
    %v399 = vmax.f32 %v343, 0.0
    %v400 = vmax.f32 %v346, 0.0
    %v401 = vmax.f32 %v351, 0.0
    %v402 = vmax.f32 %v354, 0.0
    %v403 = vmax.f32 %v359, 0.0
    %v404 = vmax.f32 %v362, 0.0
    %v405 = vmax.f32 %v367, 0.0
    %v406 = vmax.f32 %v370, 0.0
    %v407 = vmax.f32 %v375, 0.0
    %v408 = vmax.f32 %v378, 0.0
    %v409 = vmax.f32 %v383, 0.0
    %v410 = vmax.f32 %v386, 0.0
    %v411 = vmax.f32 %v391, 0.0
    %v412 = vmax.f32 %v394, 0.0
    %v413 = vpack.c.bf16 %v398, %v397
    %v414 = vpack.c.bf16 %v400, %v399
    %v415 = vpack.c.bf16 %v402, %v401
    %v416 = vpack.c.bf16 %v404, %v403
    %v417 = vpack.c.bf16 %v406, %v405
    %v418 = vpack.c.bf16 %v408, %v407
    %v419 = vpack.c.bf16 %v410, %v409
    %v420 = vpack.c.bf16 %v412, %v411
    %v421 = vld [vmem:[%s5] sm:$0xf]
    %v422 = vld [vmem:[%s5 + $0x4] sm:$0xf]
    %v423 = vld [vmem:[%s5 + $0x8] sm:$0xf]
    %v424 = vld [vmem:[%s5 + $0xc] sm:$0xf]
    %v425 = vld [vmem:[%s5 + $0x10] sm:$0xf]
    %v426 = vld [vmem:[%s5 + $0x14] sm:$0xf]
    %v427 = vld [vmem:[%s5 + $0x18] sm:$0xf]
    %v428 = vld [vmem:[%s5 + $0x1c] sm:$0xf]
    %v429 = vld [vmem:[%s6] sm:$0x1]
    %v431 = vlaneseq
    %v432 = vshrl.u32 %v431, 7
    %v433 = vsub.s32 0, %v432
    %v434 = vrot.slane %v429, %v433
    %v444 = vunpack.c.l.b16 %v421
    %v445 = vunpack.c.l.b16 %v422
    %v446 = vunpack.c.l.b16 %v423
    %v447 = vunpack.c.l.b16 %v424
    %v448 = vunpack.c.l.b16 %v425
    %v449 = vunpack.c.l.b16 %v426
    %v450 = vunpack.c.l.b16 %v427
    %v451 = vunpack.c.l.b16 %v428
    %v452 = vpack.c.b16 %v445, %v444
    %v453 = vpack.c.b16 %v447, %v446
    %v454 = vpack.c.b16 %v449, %v448
    %v455 = vpack.c.b16 %v451, %v450
    %vm460 = vcmask 523264
    %v462 = vsel %vm460, %v413, 0
    %v465 = vsel %vm460, %v414, 0
    %v468 = vsel %vm460, %v415, 0
    %v471 = vsel %vm460, %v416, 0
    %v474 = vsel %vm460, %v417, 0
    %v477 = vsel %vm460, %v418, 0
    %v480 = vsel %vm460, %v419, 0
    %v483 = vsel %vm460, %v420, 0
    %485 = vmatprep.subr.bf16.mxu0 0
    %486 = vmatpush1.bf16.msra.mxu0 %v452
    %487 = vmatprep.subr.bf16.mxu0 0
    %488 = vmatpush1.bf16.msra.mxu0 %v453
    %489 = vmatprep.subr.bf16.mxu0 0
    %490 = vmatpush1.bf16.msra.mxu0 %v454
    %491 = vmatprep.subr.bf16.mxu0 0
    %492 = vmatpush1.bf16.msra.mxu0 %v455
    %493 = vmatprep.subr.bf16.mxu0 0
    %494 = vmatpush1.bf16.msra.mxu0 0
    %495 = vmatprep.subr.bf16.mxu0 0
    %496 = vmatpush1.bf16.msra.mxu0 0
    %497 = vmatprep.subr.bf16.mxu0 0
    %498 = vmatpush1.bf16.msra.mxu0 0
    %499 = vmatprep.subr.bf16.mxu0 0
    %500 = vmatpush1.bf16.msra.mxu0 0
    %501 = vmatprep.subr.bf16.mxu0 0
    %502 = vmatpush1.bf16.msra.mxu0 0
    %503 = vmatprep.subr.bf16.mxu0 0
    %504 = vmatpush1.bf16.msra.mxu0 0
    %505 = vmatprep.subr.bf16.mxu0 0
    %506 = vmatpush1.bf16.msra.mxu0 0
    %507 = vmatprep.subr.bf16.mxu0 0
    %508 = vmatpush1.bf16.msra.mxu0 0
    %509 = vmatprep.subr.bf16.mxu0 0
    %510 = vmatpush1.bf16.msra.mxu0 0
    %511 = vmatprep.subr.bf16.mxu0 0
    %512 = vmatpush1.bf16.msra.mxu0 0
    %513 = vmatprep.subr.bf16.mxu0 0
    %514 = vmatpush1.bf16.msra.mxu0 0
    %515 = vmatprep.subr.bf16.mxu0 0
    %516 = vmatpush1.bf16.msra.mxu0 0
    %517 = vmatprep.mubr.bf16.mxu0 0
    %518 = vmatmul.mubr.bf16.gmra.mrb[0].mxu0 %v462
    %v519 = vpop.f32.mrb[0].mxu0
    %v520 = vadd.f32 %v434, %v519
    %v521 = vpop.f32.mrb[0].mxu0
    %v522 = vpop.f32.mrb[0].mxu0
    %v523 = vadd.f32 %v434, %v522
    %v524 = vpop.f32.mrb[0].mxu0
    %525 = vmatprep.mubr.bf16.mxu0 0
    %526 = vmatmul.mubr.bf16.gmra.mrb[0].mxu0 %v465
    %v527 = vpop.f32.mrb[0].mxu0
    %v528 = vadd.f32 %v434, %v527
    %v529 = vpop.f32.mrb[0].mxu0
    %v530 = vpop.f32.mrb[0].mxu0
    %v531 = vadd.f32 %v434, %v530
    %v532 = vpop.f32.mrb[0].mxu0
    %533 = vmatprep.mubr.bf16.mxu0 0
    %534 = vmatmul.mubr.bf16.gmra.mrb[0].mxu0 %v468
    %v535 = vpop.f32.mrb[0].mxu0
    %v536 = vadd.f32 %v434, %v535
    %v537 = vpop.f32.mrb[0].mxu0
    %v538 = vpop.f32.mrb[0].mxu0
    %v539 = vadd.f32 %v434, %v538
    %v540 = vpop.f32.mrb[0].mxu0
    %541 = vmatprep.mubr.bf16.mxu0 0
    %542 = vmatmul.mubr.bf16.gmra.mrb[0].mxu0 %v471
    %v543 = vpop.f32.mrb[0].mxu0
    %v544 = vadd.f32 %v434, %v543
    %v545 = vpop.f32.mrb[0].mxu0
    %v546 = vpop.f32.mrb[0].mxu0
    %v547 = vadd.f32 %v434, %v546
    %v548 = vpop.f32.mrb[0].mxu0
    %549 = vmatprep.mubr.bf16.mxu0 0
    %550 = vmatmul.mubr.bf16.gmra.mrb[0].mxu0 %v474
    %v551 = vpop.f32.mrb[0].mxu0
    %v552 = vadd.f32 %v434, %v551
    %v553 = vpop.f32.mrb[0].mxu0
    %v554 = vpop.f32.mrb[0].mxu0
    %v555 = vadd.f32 %v434, %v554
    %v556 = vpop.f32.mrb[0].mxu0
    %557 = vmatprep.mubr.bf16.mxu0 0
    %558 = vmatmul.mubr.bf16.gmra.mrb[0].mxu0 %v477
    %v559 = vpop.f32.mrb[0].mxu0
    %v560 = vadd.f32 %v434, %v559
    %v561 = vpop.f32.mrb[0].mxu0
    %v562 = vpop.f32.mrb[0].mxu0
    %v563 = vadd.f32 %v434, %v562
    %v564 = vpop.f32.mrb[0].mxu0
    %565 = vmatprep.mubr.bf16.mxu0 0
    %566 = vmatmul.mubr.bf16.gmra.mrb[0].mxu0 %v480
    %v567 = vpop.f32.mrb[0].mxu0
    %v568 = vadd.f32 %v434, %v567
    %v569 = vpop.f32.mrb[0].mxu0
    %v570 = vpop.f32.mrb[0].mxu0
    %v571 = vadd.f32 %v434, %v570
    %v572 = vpop.f32.mrb[0].mxu0
    %573 = vmatprep.mubr.bf16.mxu0 0
    %574 = vmatmul.mubr.bf16.gmra.mrb[0].mxu0 %v483
    %v575 = vpop.f32.mrb[0].mxu0
    %v576 = vadd.f32 %v434, %v575
    %v577 = vpop.f32.mrb[0].mxu0
    %v578 = vpop.f32.mrb[0].mxu0
    %v579 = vadd.f32 %v434, %v578
    %v580 = vpop.f32.mrb[0].mxu0
    %581 = vdwg.mxu0
    %v582 = vmax.f32 %v520, 0.0
    %v583 = vmax.f32 %v523, 0.0
    %v584 = vmax.f32 %v528, 0.0
    %v585 = vmax.f32 %v531, 0.0
    %v586 = vmax.f32 %v536, 0.0
    %v587 = vmax.f32 %v539, 0.0
    %v588 = vmax.f32 %v544, 0.0
    %v589 = vmax.f32 %v547, 0.0
    %v590 = vmax.f32 %v552, 0.0
    %v591 = vmax.f32 %v555, 0.0
    %v592 = vmax.f32 %v560, 0.0
    %v593 = vmax.f32 %v563, 0.0
    %v594 = vmax.f32 %v568, 0.0
    %v595 = vmax.f32 %v571, 0.0
    %v596 = vmax.f32 %v576, 0.0
    %v597 = vmax.f32 %v579, 0.0
    %v598 = vld [vmem:[%s7] sm:$0x1]
    %v599 = vld [vmem:[#allocation2] sm:$0x1]
    %601 = vset.pattern.permute.xlu0 0
    %602 = vperm.xlu0 %601, %v599
    %v603 = vpop.permute.xlu0 %602
    %v605 = vlaneseq
    %v606 = vshrl.u32 %v605, 7
    %v607 = vsub.s32 0, %v606
    %v608 = vrot.slane %v603, %v607
    %v610 = vsel %vm83, %v598, 0
    %v613 = vsel %vm83, %v582, 0
    %v616 = vsel %vm83, %v583, 0
    %v619 = vsel %vm83, %v584, 0
    %v622 = vsel %vm83, %v585, 0
    %v625 = vsel %vm83, %v586, 0
    %v628 = vsel %vm83, %v587, 0
    %v631 = vsel %vm83, %v588, 0
    %v634 = vsel %vm83, %v589, 0
    %v637 = vsel %vm83, %v590, 0
    %v640 = vsel %vm83, %v591, 0
    %v643 = vsel %vm83, %v592, 0
    %v646 = vsel %vm83, %v593, 0
    %v649 = vsel %vm83, %v594, 0
    %v652 = vsel %vm83, %v595, 0
    %v655 = vsel %vm83, %v596, 0
    %v658 = vsel %vm83, %v597, 0
    %660 = vmatprep.subr.mxu0 0.0
    %661 = vmatpush1.xpose.msra.mxu0 %v613
    %662 = vmatprep.subr.mxu0 0.0
    %663 = vmatpush1.xpose.msra.mxu0 %v616
    %664 = vmatprep.subr.mxu0 0.0
    %665 = vmatpush1.xpose.msra.mxu0 %v619
    %666 = vmatprep.subr.mxu0 0.0
    %667 = vmatpush1.xpose.msra.mxu0 %v622
    %668 = vmatprep.subr.mxu0 0.0
    %669 = vmatpush1.xpose.msra.mxu0 %v625
    %670 = vmatprep.subr.mxu0 0.0
    %671 = vmatpush1.xpose.msra.mxu0 %v628
    %672 = vmatprep.subr.mxu0 0.0
    %673 = vmatpush1.xpose.msra.mxu0 %v631
    %674 = vmatprep.subr.mxu0 0.0
    %675 = vmatpush1.xpose.msra.mxu0 %v634
    %676 = vmatprep.subr.mxu0 0.0
    %677 = vmatpush1.xpose.msra.mxu0 %v637
    %678 = vmatprep.subr.mxu0 0.0
    %679 = vmatpush1.xpose.msra.mxu0 %v640
    %680 = vmatprep.subr.mxu0 0.0
    %681 = vmatpush1.xpose.msra.mxu0 %v643
    %682 = vmatprep.subr.mxu0 0.0
    %683 = vmatpush1.xpose.msra.mxu0 %v646
    %684 = vmatprep.subr.mxu0 0.0
    %685 = vmatpush1.xpose.msra.mxu0 %v649
    %686 = vmatprep.subr.mxu0 0.0
    %687 = vmatpush1.xpose.msra.mxu0 %v652
    %688 = vmatprep.subr.mxu0 0.0
    %689 = vmatpush1.xpose.msra.mxu0 %v655
    %690 = vmatprep.subr.mxu0 0.0
    %691 = vmatpush1.xpose.msra.mxu0 %v658
    %692 = vmatprep.subr.mxu0 0.0
    %693 = vmatpush1.xpose.msra.mxu0 0.0
    %694 = vmatprep.subr.mxu0 0.0
    %695 = vmatpush1.xpose.msra.mxu0 0.0
    %696 = vmatprep.subr.mxu0 0.0
    %697 = vmatpush1.xpose.msra.mxu0 0.0
    %698 = vmatprep.subr.mxu0 0.0
    %699 = vmatpush1.xpose.msra.mxu0 0.0
    %700 = vmatprep.subr.mxu0 0.0
    %701 = vmatpush1.xpose.msra.mxu0 0.0
    %702 = vmatprep.subr.mxu0 0.0
    %703 = vmatpush1.xpose.msra.mxu0 0.0
    %704 = vmatprep.subr.mxu0 0.0
    %705 = vmatpush1.xpose.msra.mxu0 0.0
    %706 = vmatprep.subr.mxu0 0.0
    %707 = vmatpush1.xpose.msra.mxu0 0.0
    %708 = vmatprep.subr.mxu0 0.0
    %709 = vmatpush1.xpose.msra.mxu0 0.0
    %710 = vmatprep.subr.mxu0 0.0
    %711 = vmatpush1.xpose.msra.mxu0 0.0
    %712 = vmatprep.subr.mxu0 0.0
    %713 = vmatpush1.xpose.msra.mxu0 0.0
    %714 = vmatprep.subr.mxu0 0.0
    %715 = vmatpush1.xpose.msra.mxu0 0.0
    %716 = vmatprep.subr.mxu0 0.0
    %717 = vmatpush1.xpose.msra.mxu0 0.0
    %718 = vmatprep.subr.mxu0 0.0
    %719 = vmatpush1.xpose.msra.mxu0 0.0
    %720 = vmatprep.subr.mxu0 0.0
    %721 = vmatpush1.xpose.msra.mxu0 0.0
    %722 = vmatprep.subr.mxu0 0.0
    %723 = vmatpush1.xpose.msra.mxu0 0.0
    %724 = vmatprep.mubr.f32.mxu0 0.0
    %725 = vmatmul.mubr.f32.gmra.mrb[0].mxu0 %v610
    %v726 = vpop.f32.mrb[0].mxu0
    %v727 = vadd.f32 %v608, %v726
    %v728 = vpop.f32.mrb[0].mxu0
    %729 = vdwg.mxu0
    %v730 = vsub.f32 0.0, %v727
    %v731 = vmul.f32 %v730, 1.442695
    %v732 = vpow.pop %v731
    %v733 = vadd.f32 %v732, 1.0
    %v734 = vrcp.pop %v733
    %735 = vst [vmem:[#allocation3] sm:$0x1] %v734
    // Predicated region
    $region38: #{tpu_custom_call.1} parent=1 // pred_check
      _
    $region39: #{tpu_custom_call.1} parent=1 // pred_check_branch
      %737 = sbr.rel (0) target = $region41
    $region40: #{tpu_custom_call.1} parent=1 // pred_region
      %s739 = ssub.s32 16, 16
      %740 = vsyncadd [#allocation4], %s739
      %s742 = sshll.u32 [#allocation3], 4
      %s743 = int_to_ptr.vmem [resolvable:$true] %s742
      %745 = dma.vmem_to_hbm [thread:$0]  %s743, 16, %s9, [#allocation4]
    $region41: #{tpu_custom_call.1} parent=1 // pred_fallthru
      _
    // Predicated region
    $region42: #{tpu_custom_call.1} parent=1 // pred_check
      _
    $region43: #{tpu_custom_call.1} parent=1 // pred_check_branch
      %747 = sbr.rel (0) target = $region45
    $region44: #{tpu_custom_call.1} parent=1 // pred_region
      %748 = dma.done [#allocation4], 16
    $region45: #{tpu_custom_call.1} parent=1 // pred_fallthru
      _
    %749 = vsyncpa [#allocation4], 1

</llo_original>
